<compile_context>
chip_gen: v6e
topology: v6e:2x2x1
jax: 0.10.0
libtpu: 0.0.40
codegen_flags: <defaults>
</compile_context>

<pallas_src>
import functools

import jax
import jax.numpy as jnp
from jax.experimental import pallas as pl
from jax.experimental.pallas import tpu as pltpu


def _gate_conv_kernel(inp_ref, w_out_ref, w_gate_ref, b_out_ref, b_gate_ref,
                      out_ref, patches_ref, *, c_in, k_t, k_f, s_f, t_in, f_out):
    """Fused im2col + dual matmul + sigmoid gating.

    inp_ref:     (s_f, T_total, C, Fp)  polyphase-deinterleaved input (f32)
    w_out_ref:   (C_out, K)   K = k_t*k_f*C, tap-major order (dt, df, c)
    w_gate_ref:  (C_out, K)
    b_out_ref:   (C_out, 1)
    b_gate_ref:  (C_out, 1)
    out_ref:     (C_out, M)   M = T_in * F_out  (lane-dense output layout)
    patches_ref: (K, M)       VMEM scratch for the im2col matrix
    """
    x = inp_ref[...]
    # In-kernel im2col: only static, unit-stride slices (freq stride s_f was
    # folded into the polyphase phase axis r), fully unrolled (tiny counts).
    for dt in range(k_t):
        for df in range(k_f):
            r, q = df % s_f, df // s_f
            k0 = (dt * k_f + df) * c_in
            for t in range(t_in):
                piece = x[r, t + dt, :, q:q + f_out]                # (C, F_out)
                patches_ref[k0:k0 + c_in, t * f_out:(t + 1) * f_out] = piece

    p = patches_ref[...]                                            # (K, M)
    # Two lane-aligned matmuls (outputs / gate) instead of slicing a fused
    # 2*C_out result at a non-128 lane offset.
    acc_o = jnp.dot(w_out_ref[...], p, preferred_element_type=jnp.float32)
    acc_g = jnp.dot(w_gate_ref[...], p, preferred_element_type=jnp.float32)
    acc_o = acc_o + b_out_ref[...]                                  # (C_out, M)
    acc_g = acc_g + b_gate_ref[...]
    out_ref[...] = acc_o * jax.nn.sigmoid(acc_g)                    # gating in f32


def prepare_gate_conv_params(weight, bias):
    """One-time preprocessing of the PyTorch-layout conv parameters.

    weight: (2*C_out, C, k_t, k_f) OIHW;  bias: (2*C_out,)
    Returns (w_out, w_gate, b_out, b_gate); w_*: (C_out, K) with K ordered
    (k_t, k_f, C) to match the in-kernel im2col row order.
    """
    two_cout, c_in, k_t, k_f = weight.shape
    c_out = two_cout // 2
    k = k_t * k_f * c_in
    w2 = jnp.transpose(weight, (0, 2, 3, 1)).reshape(two_cout, k).astype(jnp.float32)
    b2 = bias.astype(jnp.float32).reshape(two_cout, 1)
    return w2[:c_out], w2[c_out:], b2[:c_out], b2[c_out:]


def gate_conv2d_fw(inputs, states, params, kernel_size, stride):
    """Streaming GateConv2dFW forward.

    inputs: (1, C, T_in, F)  — T_in == 1 reproduces the PyTorch module exactly;
            T_in > 1 processes a chunk of frames in one call (same math as
            T_in sequential single-frame calls).
    states: (1, C, k_t-1, F)
    params: output of prepare_gate_conv_params (hoisted out of the frame loop).
    Returns (out, new_states): out (1, C_out, T_in, F_out), new_states like states.
    """
    w_out, w_gate, b_out, b_gate = params
    k_t, k_f = kernel_size
    s_t, s_f = stride
    assert s_t == 1, "GateConv2dFW only supports stride[0] == 1"
    if inputs.ndim == 3:
        inputs = inputs[:, None]
    b, c_in, t_in, f_in = inputs.shape
    assert b == 1
    c_out = w_out.shape[0]
    k = k_t * k_f * c_in
    f_out = (f_in - k_f) // s_f + 1
    t_total = t_in + k_t - 1
    m = t_in * f_out

    # State update: alias a slice of `inputs` when possible (no extra copy).
    if k_t == 1:
        inp = inputs
        new_states = states
    else:
        inp = jnp.concatenate([states, inputs], axis=2)          # (1, C, T_total, F)
        if t_in >= k_t - 1:
            new_states = inputs[:, :, t_in - (k_t - 1):]
        else:
            new_states = inp[:, :, t_total - (k_t - 1):]

    # Polyphase freq de-interleave so the kernel only needs unit-stride slices:
    # (1, C, T_total, F) -> (s_f, T_total, C, Fp) with F index = fp*s_f + r.
    q_max = (k_f - 1) // s_f
    fp = max(-(-f_in // s_f), f_out + q_max)
    f_pad = fp * s_f
    x = inp[0].astype(jnp.float32)
    if f_pad > f_in:
        x = jnp.pad(x, ((0, 0), (0, 0), (0, f_pad - f_in)))
    x = x.reshape(c_in, t_total, fp, s_f).transpose(3, 1, 0, 2)   # (s_f,T_tot,C,Fp)

    kernel = functools.partial(_gate_conv_kernel, c_in=c_in, k_t=k_t, k_f=k_f,
                               s_f=s_f, t_in=t_in, f_out=f_out)
    out2d = pl.pallas_call(
        kernel,
        out_shape=jax.ShapeDtypeStruct((c_out, m), jnp.float32),
        grid=(1,),
        in_specs=[
            pl.BlockSpec((s_f, t_total, c_in, fp), lambda i: (0, 0, 0, 0)),
            pl.BlockSpec((c_out, k), lambda i: (0, 0)),
            pl.BlockSpec((c_out, k), lambda i: (0, 0)),
            pl.BlockSpec((c_out, 1), lambda i: (0, 0)),
            pl.BlockSpec((c_out, 1), lambda i: (0, 0)),
        ],
        out_specs=pl.BlockSpec((c_out, m), lambda i: (0, 0)),
        scratch_shapes=[pltpu.VMEM((k, m), jnp.float32)],
        compiler_params=pltpu.CompilerParams(
            dimension_semantics=("arbitrary",)),
    )(x, w_out, w_gate, b_out, b_gate)

    out = out2d.reshape(c_out, t_in, f_out)[None]                 # (1,C_out,T_in,F_out)
    return out, new_states


def _reference(inputs, states, weight, bias, kernel_size, stride):
    """Pure-JAX reference (NCHW / OIHW conv + bias + sigmoid gating)."""
    k_t = kernel_size[0]
    inp = jnp.concatenate([states, inputs], axis=2) if k_t > 1 else inputs
    new_states = inp[:, :, inp.shape[2] - (k_t - 1):] if k_t > 1 else states
    y = jax.lax.conv_general_dilated(
        inp, weight, window_strides=(1, stride[1]), padding="VALID",
        dimension_numbers=("NCHW", "OIHW", "NCHW"),
        precision=jax.lax.Precision.HIGHEST)
    y = y + bias[None, :, None, None]
    c_out = weight.shape[0] // 2
    return y[:, :c_out] * jax.nn.sigmoid(y[:, c_out:]), new_states


if __name__ == "__main__":
    C_IN, C_OUT = 4, 8
    KERNEL = (2, 3)            # (k_t, k_f)
    STRIDE = (1, 2)            # stride[0] must be 1
    F = 33                     # freq bins -> F_out = 16
    N_FRAMES = 8               # batched streaming chunk -> M = 128 (lane-dense)

    key = jax.random.PRNGKey(0)
    k1, k2, k3, k4, k5 = jax.random.split(key, 5)

    weight = 0.1 * jax.random.normal(
        k1, (2 * C_OUT, C_IN, KERNEL[0], KERNEL[1]), dtype=jnp.float32)
    bias = 0.1 * jax.random.normal(k2, (2 * C_OUT,), dtype=jnp.float32)
    params = prepare_gate_conv_params(weight, bias)   # hoisted out of frame loop

    states = jax.random.normal(k3, (1, C_IN, KERNEL[0] - 1, F), dtype=jnp.float32)
    frame = jax.random.normal(k4, (1, C_IN, 1, F), dtype=jnp.float32)
    frames = jax.random.normal(k5, (1, C_IN, N_FRAMES, F), dtype=jnp.float32)

    run = jax.jit(gate_conv2d_fw, static_argnums=(3, 4))

    # 1) Exact module semantics: single frame per call.
    out1, st1 = run(frame, states, params, KERNEL, STRIDE)
    out1 = jax.block_until_ready(out1)
    st1 = jax.block_until_ready(st1)
    ref1, refst1 = _reference(frame, states, weight, bias, KERNEL, STRIDE)
    assert out1.shape == ref1.shape, (out1.shape, ref1.shape)
    assert st1.shape == refst1.shape
    assert jnp.allclose(out1, ref1, atol=1e-5, rtol=1e-5)
    assert jnp.allclose(st1, refst1)

    # 2) Batched streaming chunk (lane-dense output path, amortized launch).
    out2, st2 = run(frames, states, params, KERNEL, STRIDE)
    out2 = jax.block_until_ready(out2)
    st2 = jax.block_until_ready(st2)
    ref2, refst2 = _reference(frames, states, weight, bias, KERNEL, STRIDE)
    assert out2.shape == ref2.shape, (out2.shape, ref2.shape)
    assert st2.shape == refst2.shape
    assert jnp.allclose(out2, ref2, atol=1e-5, rtol=1e-5)
    assert jnp.allclose(st2, refst2)

    print("KERNEL_OK")
</pallas_src>

<mosaic_0001>
module attributes {stable_mosaic.version = 11 : i64} {
  func.func @_gate_conv_kernel(%arg0: i32, %arg1: memref<2x2x4x17xf32, #tpu.memory_space<vmem>>, %arg2: memref<8x24xf32, #tpu.memory_space<vmem>>, %arg3: memref<8x24xf32, #tpu.memory_space<vmem>>, %arg4: memref<8x1xf32, #tpu.memory_space<vmem>>, %arg5: memref<8x1xf32, #tpu.memory_space<vmem>>, %arg6: memref<8x16xf32, #tpu.memory_space<vmem>>, %arg7: memref<24x16xf32, #tpu.memory_space<vmem>>) attributes {dimension_semantics = [#tpu.dimension_semantics<arbitrary>], iteration_bounds = array<i64: 1>, scalar_prefetch = 0 : i64, scratch_operands = 1 : i64, tpu.core_type = #tpu.core_type<tc>, window_params = [{pipeline_mode = #tpu.pipeline_mode<synchronous>, transform_indices = @transform_0, window_bounds = array<i64: 2, 2, 4, 17>}, {pipeline_mode = #tpu.pipeline_mode<synchronous>, transform_indices = @transform_1, window_bounds = array<i64: 8, 24>}, {pipeline_mode = #tpu.pipeline_mode<synchronous>, transform_indices = @transform_2, window_bounds = array<i64: 8, 24>}, {pipeline_mode = #tpu.pipeline_mode<synchronous>, transform_indices = @transform_3, window_bounds = array<i64: 8, 1>}, {pipeline_mode = #tpu.pipeline_mode<synchronous>, transform_indices = @transform_4, window_bounds = array<i64: 8, 1>}, {pipeline_mode = #tpu.pipeline_mode<synchronous>, transform_indices = @transform_5, window_bounds = array<i64: 8, 16>}]} {
    %c0 = arith.constant 0 : index
    %c0_0 = arith.constant 0 : index
    %c0_1 = arith.constant 0 : index
    %c0_2 = arith.constant 0 : index
    %0 = vector.load %arg1[%c0, %c0_0, %c0_1, %c0_2] : memref<2x2x4x17xf32, #tpu.memory_space<vmem>>, vector<2x2x4x17xf32>
    %1 = vector.extract_strided_slice %0 {offsets = [0, 0, 0, 0], sizes = [1, 1, 4, 16], strides = [1, 1, 1, 1]} : vector<2x2x4x17xf32> to vector<1x1x4x16xf32>
    %2 = vector.shape_cast %1 : vector<1x1x4x16xf32> to vector<4x16xf32>
    %c0_3 = arith.constant 0 : index
    %c0_4 = arith.constant 0 : index
    %3 = vector.load %arg7[%c0_3, %c0_4] : memref<24x16xf32, #tpu.memory_space<vmem>>, vector<4x16xf32>
    tpu.vector_store %arg7[%c0_3, %c0_4], %2 {strides = array<i32>} : memref<24x16xf32, #tpu.memory_space<vmem>>, vector<4x16xf32>,
    %4 = vector.extract_strided_slice %0 {offsets = [1, 0, 0, 0], sizes = [1, 1, 4, 16], strides = [1, 1, 1, 1]} : vector<2x2x4x17xf32> to vector<1x1x4x16xf32>
    %5 = vector.shape_cast %4 : vector<1x1x4x16xf32> to vector<4x16xf32>
    %c4 = arith.constant 4 : index
    %c0_5 = arith.constant 0 : index
    %6 = vector.load %arg7[%c4, %c0_5] : memref<24x16xf32, #tpu.memory_space<vmem>>, vector<4x16xf32>
    tpu.vector_store %arg7[%c4, %c0_5], %5 {strides = array<i32>} : memref<24x16xf32, #tpu.memory_space<vmem>>, vector<4x16xf32>,
    %7 = vector.extract_strided_slice %0 {offsets = [0, 0, 0, 1], sizes = [1, 1, 4, 16], strides = [1, 1, 1, 1]} : vector<2x2x4x17xf32> to vector<1x1x4x16xf32>
    %8 = vector.shape_cast %7 : vector<1x1x4x16xf32> to vector<4x16xf32>
    %c8 = arith.constant 8 : index
    %c0_6 = arith.constant 0 : index
    %9 = vector.load %arg7[%c8, %c0_6] : memref<24x16xf32, #tpu.memory_space<vmem>>, vector<4x16xf32>
    tpu.vector_store %arg7[%c8, %c0_6], %8 {strides = array<i32>} : memref<24x16xf32, #tpu.memory_space<vmem>>, vector<4x16xf32>,
    %10 = vector.extract_strided_slice %0 {offsets = [0, 1, 0, 0], sizes = [1, 1, 4, 16], strides = [1, 1, 1, 1]} : vector<2x2x4x17xf32> to vector<1x1x4x16xf32>
    %11 = vector.shape_cast %10 : vector<1x1x4x16xf32> to vector<4x16xf32>
    %c12 = arith.constant 12 : index
    %c0_7 = arith.constant 0 : index
    %12 = vector.load %arg7[%c12, %c0_7] : memref<24x16xf32, #tpu.memory_space<vmem>>, vector<4x16xf32>
    tpu.vector_store %arg7[%c12, %c0_7], %11 {strides = array<i32>} : memref<24x16xf32, #tpu.memory_space<vmem>>, vector<4x16xf32>,
    %13 = vector.extract_strided_slice %0 {offsets = [1, 1, 0, 0], sizes = [1, 1, 4, 16], strides = [1, 1, 1, 1]} : vector<2x2x4x17xf32> to vector<1x1x4x16xf32>
    %14 = vector.shape_cast %13 : vector<1x1x4x16xf32> to vector<4x16xf32>
    %c16 = arith.constant 16 : index
    %c0_8 = arith.constant 0 : index
    %15 = vector.load %arg7[%c16, %c0_8] : memref<24x16xf32, #tpu.memory_space<vmem>>, vector<4x16xf32>
    tpu.vector_store %arg7[%c16, %c0_8], %14 {strides = array<i32>} : memref<24x16xf32, #tpu.memory_space<vmem>>, vector<4x16xf32>,
    %16 = vector.extract_strided_slice %0 {offsets = [0, 1, 0, 1], sizes = [1, 1, 4, 16], strides = [1, 1, 1, 1]} : vector<2x2x4x17xf32> to vector<1x1x4x16xf32>
    %17 = vector.shape_cast %16 : vector<1x1x4x16xf32> to vector<4x16xf32>
    %c20 = arith.constant 20 : index
    %c0_9 = arith.constant 0 : index
    %18 = vector.load %arg7[%c20, %c0_9] : memref<24x16xf32, #tpu.memory_space<vmem>>, vector<4x16xf32>
    tpu.vector_store %arg7[%c20, %c0_9], %17 {strides = array<i32>} : memref<24x16xf32, #tpu.memory_space<vmem>>, vector<4x16xf32>,
    %c0_10 = arith.constant 0 : index
    %c0_11 = arith.constant 0 : index
    %19 = vector.load %arg7[%c0_10, %c0_11] : memref<24x16xf32, #tpu.memory_space<vmem>>, vector<24x16xf32>
    %c0_12 = arith.constant 0 : index
    %c0_13 = arith.constant 0 : index
    %20 = vector.load %arg2[%c0_12, %c0_13] : memref<8x24xf32, #tpu.memory_space<vmem>>, vector<8x24xf32>
    %cst = arith.constant dense<0.000000e+00> : vector<8x16xf32>
    %21 = tpu.matmul %20, %19, %cst {dimension_numbers = #tpu.dot_dimension_numbers<[1], [0], [0], [1], [0, 0, 1, 1], [], []>} : vector<8x24xf32>, vector<24x16xf32>, vector<8x16xf32> -> vector<8x16xf32>
    %c0_14 = arith.constant 0 : index
    %c0_15 = arith.constant 0 : index
    %22 = vector.load %arg3[%c0_14, %c0_15] : memref<8x24xf32, #tpu.memory_space<vmem>>, vector<8x24xf32>
    %cst_16 = arith.constant dense<0.000000e+00> : vector<8x16xf32>
    %23 = tpu.matmul %22, %19, %cst_16 {dimension_numbers = #tpu.dot_dimension_numbers<[1], [0], [0], [1], [0, 0, 1, 1], [], []>} : vector<8x24xf32>, vector<24x16xf32>, vector<8x16xf32> -> vector<8x16xf32>
    %c0_17 = arith.constant 0 : index
    %c0_18 = arith.constant 0 : index
    %24 = vector.load %arg4[%c0_17, %c0_18] : memref<8x1xf32, #tpu.memory_space<vmem>>, vector<8x1xf32>
    %25 = vector.broadcast %24 : vector<8x1xf32> to vector<8x16xf32>
    %26 = arith.addf %21, %25 : vector<8x16xf32>
    %c0_19 = arith.constant 0 : index
    %c0_20 = arith.constant 0 : index
    %27 = vector.load %arg5[%c0_19, %c0_20] : memref<8x1xf32, #tpu.memory_space<vmem>>, vector<8x1xf32>
    %28 = vector.broadcast %27 : vector<8x1xf32> to vector<8x16xf32>
    %29 = arith.addf %23, %28 : vector<8x16xf32>
    %30 = arith.negf %29 : vector<8x16xf32>
    %31 = math.exp %30 : vector<8x16xf32>
    %cst_21 = arith.constant 1.000000e+00 : f32
    %32 = vector.broadcast %cst_21 : f32 to vector<8x16xf32>
    %33 = arith.addf %32, %31 : vector<8x16xf32>
    %34 = arith.divf %32, %33 : vector<8x16xf32>
    %35 = arith.mulf %26, %34 : vector<8x16xf32>
    %c0_22 = arith.constant 0 : index
    %c0_23 = arith.constant 0 : index
    %36 = vector.load %arg6[%c0_22, %c0_23] : memref<8x16xf32, #tpu.memory_space<vmem>>, vector<8x16xf32>
    tpu.vector_store %arg6[%c0_22, %c0_23], %35 {strides = array<i32>} : memref<8x16xf32, #tpu.memory_space<vmem>>, vector<8x16xf32>,
    return
  }
  func.func @transform_0(%arg0: i32) -> (i32, i32, i32, i32) {
    %c0_i32 = arith.constant 0 : i32
    %c0_i32_0 = arith.constant 0 : i32
    %c0_i32_1 = arith.constant 0 : i32
    %c0_i32_2 = arith.constant 0 : i32
    %c0_i32_3 = arith.constant 0 : i32
    return %c0_i32, %c0_i32_0, %c0_i32_1, %c0_i32_2 : i32, i32, i32, i32
  }
  func.func @transform_1(%arg0: i32) -> (i32, i32) {
    %c0_i32 = arith.constant 0 : i32
    %c0_i32_0 = arith.constant 0 : i32
    %c0_i32_1 = arith.constant 0 : i32
    return %c0_i32, %c0_i32_0 : i32, i32
  }
  func.func @transform_2(%arg0: i32) -> (i32, i32) {
    %c0_i32 = arith.constant 0 : i32
    %c0_i32_0 = arith.constant 0 : i32
    %c0_i32_1 = arith.constant 0 : i32
    return %c0_i32, %c0_i32_0 : i32, i32
  }
  func.func @transform_3(%arg0: i32) -> (i32, i32) {
    %c0_i32 = arith.constant 0 : i32
    %c0_i32_0 = arith.constant 0 : i32
    %c0_i32_1 = arith.constant 0 : i32
    return %c0_i32, %c0_i32_0 : i32, i32
  }
  func.func @transform_4(%arg0: i32) -> (i32, i32) {
    %c0_i32 = arith.constant 0 : i32
    %c0_i32_0 = arith.constant 0 : i32
    %c0_i32_1 = arith.constant 0 : i32
    return %c0_i32, %c0_i32_0 : i32, i32
  }
  func.func @transform_5(%arg0: i32) -> (i32, i32) {
    %c0_i32 = arith.constant 0 : i32
    %c0_i32_0 = arith.constant 0 : i32
    %c0_i32_1 = arith.constant 0 : i32
    return %c0_i32, %c0_i32_0 : i32, i32
  }
}

</mosaic_0001>

<llo_original>
// kernel: gate_conv2d_fw.1
$region0: #{gate_conv2d_fw.1}
  #allocation0 [shape = 'u32[]', space=smem, size = 0x4, offset = 0x4, fixed_abs, tag = 'smem constant byte address 0x4 - core index']
  #allocation1 [shape = 'u32[144,128]{1,0:T(1,128)}', space=vmem, size = 0x12000, scoped, tag = 'internal scratch']
  #allocation2 [shape = 'f32[24,16]{1,0:T(8,128)}', space=vmem, size = 0x3000, scoped, tag = 'scratch operand']
  %s0 = inlined_call_operand.vmem [shape: f32[2,2,4,17], index: 0, kind: input, shape index: {}]
  %s1 = inlined_call_operand.vmem [shape: f32[8,24], index: 1, kind: input, shape index: {}]
  %s2 = inlined_call_operand.vmem [shape: f32[8,24], index: 2, kind: input, shape index: {}]
  %s3 = inlined_call_operand.vmem [shape: f32[8,1], index: 3, kind: input, shape index: {}]
  %s4 = inlined_call_operand.vmem [shape: f32[8,1], index: 4, kind: input, shape index: {}]
  %s5 = inlined_call_operand.hbm [shape: f32[8,16], index: 5, kind: output, shape index: {}]
  %s6 = sld [smem:[#allocation0]]
  $region30: #{gate_conv2d_fw.1} parent=0
    _
  %s8 = ssub.s32 1, %s6
  %s9 = scalar_select 0, %s8, %s6
  $region1: #{gate_conv2d_fw.1} parent=0
    #allocation3 [shape = 'u8[4096]{0}', space=vmem, size = 0x1000, scoped, tag = 'output window, operand 0, single buffered']
    #allocation4 [shape = 's32[1]{0}', space=sflag, size = 0x4, scoped, tag = 'scoped memory for gate_conv2d_fw.1']
    %10 = vsyncpa [#allocation4], 0
    // Predicated region
    $region2: #{gate_conv2d_fw.1} parent=1 // pred_check
      _
    $region3: #{gate_conv2d_fw.1} parent=1 // pred_check_branch
      %12 = sbr.rel (0) target = $region5
    $region4: #{gate_conv2d_fw.1} parent=1 // pred_region
      _
    $region5: #{gate_conv2d_fw.1} parent=1 // pred_fallthru
      _
    // Predicated region
    $region6: #{gate_conv2d_fw.1} parent=1 // pred_check
      _
    $region7: #{gate_conv2d_fw.1} parent=1 // pred_check_branch
      %14 = sbr.rel (0) target = $region9
    $region8: #{gate_conv2d_fw.1} parent=1 // pred_region
      _
    $region9: #{gate_conv2d_fw.1} parent=1 // pred_fallthru
      _
    // Predicated region
    $region10: #{gate_conv2d_fw.1} parent=1 // pred_check
      _
    $region11: #{gate_conv2d_fw.1} parent=1 // pred_check_branch
      %16 = sbr.rel (0) target = $region13
    $region12: #{gate_conv2d_fw.1} parent=1 // pred_region
      _
    $region13: #{gate_conv2d_fw.1} parent=1 // pred_fallthru
      _
    // Predicated region
    $region14: #{gate_conv2d_fw.1} parent=1 // pred_check
      _
    $region15: #{gate_conv2d_fw.1} parent=1 // pred_check_branch
      %18 = sbr.rel (0) target = $region17
    $region16: #{gate_conv2d_fw.1} parent=1 // pred_region
      _
    $region17: #{gate_conv2d_fw.1} parent=1 // pred_fallthru
      _
    // Predicated region
    $region18: #{gate_conv2d_fw.1} parent=1 // pred_check
      _
    $region19: #{gate_conv2d_fw.1} parent=1 // pred_check_branch
      %20 = sbr.rel (0) target = $region21
    $region20: #{gate_conv2d_fw.1} parent=1 // pred_region
      _
    $region21: #{gate_conv2d_fw.1} parent=1 // pred_fallthru
      _
    %v21 = vld [vmem:[%s0] sm:$0xf]
    %v22 = vld [vmem:[%s0 + $0x4] sm:$0xf]
    %v23 = vld [vmem:[%s0 + $0x8] sm:$0xf]
    %v24 = vld [vmem:[%s0 + $0xc] sm:$0xf]
    %vm25 = vcmask 125952
    %26 = vst.msk [vmem:[#allocation2] sm:$0xf] %vm25, %v21
    %27 = vst.msk [vmem:[#allocation2 + $0x4] sm:$0xf] %vm25, %v23
    %29 = vrot.lane.b32.xlu0 %v21, 127
    %v30 = vpop.permute.xlu0 %29
    %32 = vst.msk [vmem:[#allocation2 + $0x8] sm:$0xf] %vm25, %v30
    %33 = vst.msk [vmem:[#allocation2 + $0xc] sm:$0xf] %vm25, %v22
    %34 = vst.msk [vmem:[#allocation2 + $0x10] sm:$0xf] %vm25, %v24
    %36 = vrot.lane.b32.xlu0 %v22, 127
    %v37 = vpop.permute.xlu0 %36
    %39 = vst.msk [vmem:[#allocation2 + $0x14] sm:$0xf] %vm25, %v37
    %v40 = vld [vmem:[#allocation2] sm:$0xff]
    %v41 = vld [vmem:[#allocation2 + $0x8] sm:$0xff]
    %v42 = vld [vmem:[#allocation2 + $0x10] sm:$0xff]
    %v43 = vld [vmem:[%s1] sm:$0xff]
    %v44 = vld [vmem:[%s2] sm:$0xff]
    %v45 = vld [vmem:[%s3] sm:$0xff]
    %47 = vset.pattern.permute.xlu0 0
    %48 = vperm.xlu0 %47, %v45
    %v49 = vpop.permute.xlu0 %48
    %vm51 = vcmask 195584
    %v53 = vsel %vm51, %v43, 0
    %55 = vmatprep.subr.mxu0 0.0
    %56 = vmatpush1.msra.mxu0 0.0
    %57 = vmatprep.subr.mxu0 0.0
    %58 = vmatpush1.msra.mxu0 0.0
    %59 = vmatprep.subr.mxu0 0.0
    %60 = vmatpush1.msra.mxu0 0.0
    %61 = vmatprep.subr.mxu0 0.0
    %62 = vmatpush1.msra.mxu0 0.0
    %63 = vmatprep.subr.mxu0 0.0
    %64 = vmatpush1.msra.mxu0 0.0
    %65 = vmatprep.subr.mxu0 0.0
    %66 = vmatpush1.msra.mxu0 0.0
    %67 = vmatprep.subr.mxu0 0.0
    %68 = vmatpush1.msra.mxu0 0.0
    %69 = vmatprep.subr.mxu0 0.0
    %70 = vmatpush1.msra.mxu0 0.0
    %71 = vmatprep.subr.mxu0 0.0
    %72 = vmatpush1.msra.mxu0 0.0
    %73 = vmatprep.subr.mxu0 0.0
    %74 = vmatpush1.msra.mxu0 0.0
    %75 = vmatprep.subr.mxu0 0.0
    %76 = vmatpush1.msra.mxu0 0.0
    %77 = vmatprep.subr.mxu0 0.0
    %78 = vmatpush1.msra.mxu0 0.0
    %79 = vmatprep.subr.mxu0 0.0
    %80 = vmatpush1.msra.mxu0 0.0
    %81 = vmatprep.subr.mxu0 0.0
    %82 = vmatpush1.msra.mxu0 %v42
    %83 = vmatprep.subr.mxu0 0.0
    %84 = vmatpush1.msra.mxu0 %v41
    %85 = vmatprep.subr.mxu0 0.0
    %86 = vmatpush1.msra.mxu0 %v40
    %87 = vmatprep.subr.mxu0 0.0
    %88 = vmatpush2.msra.mxu0 0.0
    %89 = vmatprep.subr.mxu0 0.0
    %90 = vmatpush2.msra.mxu0 0.0
    %91 = vmatprep.subr.mxu0 0.0
    %92 = vmatpush2.msra.mxu0 0.0
    %93 = vmatprep.subr.mxu0 0.0
    %94 = vmatpush2.msra.mxu0 0.0
    %95 = vmatprep.subr.mxu0 0.0
    %96 = vmatpush2.msra.mxu0 0.0
    %97 = vmatprep.subr.mxu0 0.0
    %98 = vmatpush2.msra.mxu0 0.0
    %99 = vmatprep.subr.mxu0 0.0
    %100 = vmatpush2.msra.mxu0 0.0
    %101 = vmatprep.subr.mxu0 0.0
    %102 = vmatpush2.msra.mxu0 0.0
    %103 = vmatprep.subr.mxu0 0.0
    %104 = vmatpush2.msra.mxu0 0.0
    %105 = vmatprep.subr.mxu0 0.0
    %106 = vmatpush2.msra.mxu0 0.0
    %107 = vmatprep.subr.mxu0 0.0
    %108 = vmatpush2.msra.mxu0 0.0
    %109 = vmatprep.subr.mxu0 0.0
    %110 = vmatpush2.msra.mxu0 0.0
    %111 = vmatprep.subr.mxu0 0.0
    %112 = vmatpush2.msra.mxu0 0.0
    %113 = vmatprep.subr.mxu0 0.0
    %114 = vmatpush2.msra.mxu0 0.0
    %115 = vmatprep.subr.mxu0 0.0
    %116 = vmatpush2.msra.mxu0 0.0
    %117 = vmatprep.subr.mxu0 0.0
    %118 = vmatpush2.msra.mxu0 0.0
    %119 = vmatprep.mubr.f32.mxu0 0.0
    %120 = vmatmul.mubr.f32.gmra.mxu0 %v53
    %v121 = vpop.f32.mrf.mxu0
    %v122 = vadd.f32 %v49, %v121
    %v123 = vpop.f32.mrf.mxu0
    %124 = vdwg.mxu0
    %v125 = vld [vmem:[%s4] sm:$0xff]
    %127 = vset.pattern.permute.xlu0 0
    %128 = vperm.xlu0 %127, %v125
    %v129 = vpop.permute.xlu0 %128
    %v132 = vsel %vm51, %v44, 0
    %134 = vmatprep.subr.mxu0 0.0
    %135 = vmatpush1.msra.mxu0 0.0
    %136 = vmatprep.subr.mxu0 0.0
    %137 = vmatpush1.msra.mxu0 0.0
    %138 = vmatprep.subr.mxu0 0.0
    %139 = vmatpush1.msra.mxu0 0.0
    %140 = vmatprep.subr.mxu0 0.0
    %141 = vmatpush1.msra.mxu0 0.0
    %142 = vmatprep.subr.mxu0 0.0
    %143 = vmatpush1.msra.mxu0 0.0
    %144 = vmatprep.subr.mxu0 0.0
    %145 = vmatpush1.msra.mxu0 0.0
    %146 = vmatprep.subr.mxu0 0.0
    %147 = vmatpush1.msra.mxu0 0.0
    %148 = vmatprep.subr.mxu0 0.0
    %149 = vmatpush1.msra.mxu0 0.0
    %150 = vmatprep.subr.mxu0 0.0
    %151 = vmatpush1.msra.mxu0 0.0
    %152 = vmatprep.subr.mxu0 0.0
    %153 = vmatpush1.msra.mxu0 0.0
    %154 = vmatprep.subr.mxu0 0.0
    %155 = vmatpush1.msra.mxu0 0.0
    %156 = vmatprep.subr.mxu0 0.0
    %157 = vmatpush1.msra.mxu0 0.0
    %158 = vmatprep.subr.mxu0 0.0
    %159 = vmatpush1.msra.mxu0 0.0
    %160 = vmatprep.subr.mxu0 0.0
    %161 = vmatpush1.msra.mxu0 %v42
    %162 = vmatprep.subr.mxu0 0.0
    %163 = vmatpush1.msra.mxu0 %v41
    %164 = vmatprep.subr.mxu0 0.0
    %165 = vmatpush1.msra.mxu0 %v40
    %166 = vmatprep.subr.mxu0 0.0
    %167 = vmatpush2.msra.mxu0 0.0
    %168 = vmatprep.subr.mxu0 0.0
    %169 = vmatpush2.msra.mxu0 0.0
    %170 = vmatprep.subr.mxu0 0.0
    %171 = vmatpush2.msra.mxu0 0.0
    %172 = vmatprep.subr.mxu0 0.0
    %173 = vmatpush2.msra.mxu0 0.0
    %174 = vmatprep.subr.mxu0 0.0
    %175 = vmatpush2.msra.mxu0 0.0
    %176 = vmatprep.subr.mxu0 0.0
    %177 = vmatpush2.msra.mxu0 0.0
    %178 = vmatprep.subr.mxu0 0.0
    %179 = vmatpush2.msra.mxu0 0.0
    %180 = vmatprep.subr.mxu0 0.0
    %181 = vmatpush2.msra.mxu0 0.0
    %182 = vmatprep.subr.mxu0 0.0
    %183 = vmatpush2.msra.mxu0 0.0
    %184 = vmatprep.subr.mxu0 0.0
    %185 = vmatpush2.msra.mxu0 0.0
    %186 = vmatprep.subr.mxu0 0.0
    %187 = vmatpush2.msra.mxu0 0.0
    %188 = vmatprep.subr.mxu0 0.0
    %189 = vmatpush2.msra.mxu0 0.0
    %190 = vmatprep.subr.mxu0 0.0
    %191 = vmatpush2.msra.mxu0 0.0
    %192 = vmatprep.subr.mxu0 0.0
    %193 = vmatpush2.msra.mxu0 0.0
    %194 = vmatprep.subr.mxu0 0.0
    %195 = vmatpush2.msra.mxu0 0.0
    %196 = vmatprep.subr.mxu0 0.0
    %197 = vmatpush2.msra.mxu0 0.0
    %198 = vmatprep.mubr.f32.mxu0 0.0
    %199 = vmatmul.mubr.f32.gmra.mxu0 %v132
    %v200 = vpop.f32.mrf.mxu0
    %v201 = vadd.f32 %v129, %v200
    %v202 = vpop.f32.mrf.mxu0
    %203 = vdwg.mxu0
    %v204 = vxor.u32 %v201, 2147483648
    %v205 = vmul.f32 %v204, 1.442695
    %v206 = vpow.pop %v205
    %v207 = vadd.f32 %v206, 1.0
    %v208 = vrcp.pop %v207
    %v209 = vmul.f32 1.0, %v208
    %v210 = vmul.f32 %v122, %v209
    %vm211 = vcmask 130048
    %212 = vst.msk [vmem:[#allocation3] sm:$0xff] %vm211, %v210
    // Predicated region
    $region22: #{gate_conv2d_fw.1} parent=1 // pred_check
      _
    $region23: #{gate_conv2d_fw.1} parent=1 // pred_check_branch
      %214 = sbr.rel (0) target = $region25
    $region24: #{gate_conv2d_fw.1} parent=1 // pred_region
      %s216 = ssub.s32 128, 128
      %217 = vsyncadd [#allocation4], %s216
      %s219 = sshll.u32 [#allocation3], 4
      %s220 = int_to_ptr.vmem [resolvable:$true] %s219
      %222 = dma.vmem_to_hbm [thread:$0]  %s220, 128, %s5, [#allocation4]
    $region25: #{gate_conv2d_fw.1} parent=1 // pred_fallthru
      _
    // Predicated region
    $region26: #{gate_conv2d_fw.1} parent=1 // pred_check
      _
    $region27: #{gate_conv2d_fw.1} parent=1 // pred_check_branch
      %224 = sbr.rel (0) target = $region29
    $region28: #{gate_conv2d_fw.1} parent=1 // pred_region
      %225 = dma.done [#allocation4], 128
    $region29: #{gate_conv2d_fw.1} parent=1 // pred_fallthru
      _
    %226 = vsyncpa [#allocation4], 1

</llo_original>
